<compile_context>
chip_gen: v6e
topology: v6e:2x2x1
jax: 0.10.0
libtpu: 0.0.40
codegen_flags: <defaults>
</compile_context>

<pallas_src>
import jax
import jax.numpy as jnp
from jax.experimental import pallas as pl
from jax.experimental.pallas import tpu as pltpu

INPUT_DIM = 784            # forward() hard-codes view(-1, 784)
HIDDEN_DIM = 32
LATENT_DIM = 8

_TB_MAX = 1024             # max batch-tile rows (review: 512-1024)
_VMEM_LIMIT = 48 * 1024 * 1024


def _ae_kernel(x_ref,
               w1_ref, b1_ref, w2_ref, b2_ref,
               w34_ref, b34_ref,                 # fused enc-L3 @ dec-L1
               w5_ref, b5_ref, w6_ref, b6_ref,
               out_ref):
    # x block arrives as f32 straight from HBM; cast to bf16 in VMEM (VPU
    # slack) instead of a separate wrapper-side HBM pass.
    x = x_ref[...].astype(jnp.bfloat16)

    h = jnp.dot(x, w1_ref[...], preferred_element_type=jnp.float32) + b1_ref[...]
    h = jnp.maximum(h, 0.0)

    h = jnp.dot(h.astype(jnp.bfloat16), w2_ref[...],
                preferred_element_type=jnp.float32) + b2_ref[...]
    h = jnp.maximum(h, 0.0)

    # Fused latent boundary: z = h@w3 + b3 ; d = z@w4 + b4  ==  h@w34 + b34
    h = jnp.dot(h.astype(jnp.bfloat16), w34_ref[...],
                preferred_element_type=jnp.float32) + b34_ref[...]
    h = jnp.maximum(h, 0.0)

    h = jnp.dot(h.astype(jnp.bfloat16), w5_ref[...],
                preferred_element_type=jnp.float32) + b5_ref[...]
    h = jnp.maximum(h, 0.0)

    logits = jnp.dot(h.astype(jnp.bfloat16), w6_ref[...],
                     preferred_element_type=jnp.float32) + b6_ref[...]

    # Numerically stable sigmoid; exact divide (HBM-bound kernel -> free).
    z = jnp.exp(-jnp.abs(logits))
    sig = jnp.where(logits >= 0.0, 1.0 / (1.0 + z), z / (1.0 + z))
    out_ref[...] = sig.astype(out_ref.dtype)


def _cdiv(a, b):
    return (a + b - 1) // b


def _round_up(n, m):
    return _cdiv(n, m) * m


def _choose_tb(B):
    """Batch tile: multiple of 16 (bf16 packing), >=2 tiles when possible
    (v7x megacore), capped at _TB_MAX, small B_pad - B waste."""
    if B <= 16:
        return 16
    n_tiles = max(2, _cdiv(B, _TB_MAX))
    return min(_TB_MAX, _round_up(_cdiv(B, n_tiles), 16))


def ae_forward(x, params, out_dtype=jnp.float32):
    """Mirrors AE.forward: flatten to (-1, 784), encode, decode, sigmoid.

    out_dtype=jnp.bfloat16 halves output HBM store traffic if the consumer
    tolerates bf16 (default keeps the module's f32 semantics).
    """
    x2d = x.reshape(-1, INPUT_DIM)
    if x2d.dtype != jnp.float32:
        x2d = x2d.astype(jnp.float32)
    B = x2d.shape[0]

    (w1, b1, w2, b2, w3, b3, w4, b4, w5, b5, w6, b6) = params

    # ---- one-time param prep (tiny: ~100 KB total) --------------------------
    # Fuse the activation-free latent boundary in f32, then cast to bf16.
    w34 = w3 @ w4                       # (hidden, hidden)
    b34 = b3 @ w4 + b4                  # (1, hidden)

    weights_bf16 = [w.astype(jnp.bfloat16) for w in (w1, w2, w34, w5, w6)]
    biases_f32 = [b1, b2, b34, b5, b6]
    kparams = [weights_bf16[0], biases_f32[0],
               weights_bf16[1], biases_f32[1],
               weights_bf16[2], biases_f32[2],
               weights_bf16[3], biases_f32[3],
               weights_bf16[4], biases_f32[4]]

    # ---- batch tiling --------------------------------------------------------
    TB = _choose_tb(B)
    B_pad = _round_up(B, TB)
    grid = (B_pad // TB,)

    # Only pad batch rows (no column pad, no dtype pass). Skip entirely if
    # B is already tile-aligned.
    if B_pad != B:
        x_in = jnp.pad(x2d, ((0, B_pad - B), (0, 0)))
    else:
        x_in = x2d

    def full_spec(a):
        # Constant-index full-array block -> resident in VMEM across tiles.
        return pl.BlockSpec(a.shape, lambda i: (0, 0))

    in_specs = [pl.BlockSpec((TB, INPUT_DIM), lambda i: (i, 0))] + \
               [full_spec(p) for p in kparams]
    out_spec = pl.BlockSpec((TB, INPUT_DIM), lambda i: (i, 0))

    out_pad = pl.pallas_call(
        _ae_kernel,
        out_shape=jax.ShapeDtypeStruct((B_pad, INPUT_DIM), out_dtype),
        grid_spec=pltpu.PrefetchScalarGridSpec(
            num_scalar_prefetch=0,
            grid=grid,
            in_specs=in_specs,
            out_specs=out_spec,
        ),
        compiler_params=pltpu.CompilerParams(
            dimension_semantics=("parallel",),     # megacore on v7x
            vmem_limit_bytes=_VMEM_LIMIT),
    )(x_in, *kparams)

    return out_pad[:B] if B_pad != B else out_pad


def init_params(key, input_dim=INPUT_DIM, latent_dim=LATENT_DIM,
                hidden_dim=HIDDEN_DIM):
    """Deterministic init. Weights stored as (in, out); biases as (1, out)."""
    dims = [
        (input_dim, hidden_dim),   # enc L1
        (hidden_dim, hidden_dim),  # enc L2
        (hidden_dim, latent_dim),  # enc L3
        (latent_dim, hidden_dim),  # dec L1
        (hidden_dim, hidden_dim),  # dec L2
        (hidden_dim, input_dim),   # dec L3
    ]
    params = []
    for (fan_in, fan_out) in dims:
        key, kw, kb = jax.random.split(key, 3)
        bound = 1.0 / jnp.sqrt(fan_in)  # PyTorch nn.Linear default init range
        w = jax.random.uniform(kw, (fan_in, fan_out), jnp.float32, -bound, bound)
        b = jax.random.uniform(kb, (1, fan_out), jnp.float32, -bound, bound)
        params += [w, b]
    return tuple(params)


def ae_reference(x, params):
    """Plain-JAX f32 reference for correctness check."""
    (w1, b1, w2, b2, w3, b3, w4, b4, w5, b5, w6, b6) = params
    h = x.reshape(-1, INPUT_DIM).astype(jnp.float32)
    h = jnp.maximum(h @ w1 + b1, 0.0)
    h = jnp.maximum(h @ w2 + b2, 0.0)
    z = h @ w3 + b3
    d = jnp.maximum(z @ w4 + b4, 0.0)
    d = jnp.maximum(d @ w5 + b5, 0.0)
    return jax.nn.sigmoid(d @ w6 + b6)


if __name__ == "__main__":
    key = jax.random.PRNGKey(0)
    key, kx = jax.random.split(key)

    # MNIST-like NCHW input: batch=2, channels=1, spatial=28x28 -> 784 features
    x = jax.random.normal(kx, (2, 1, 28, 28), dtype=jnp.float32)

    params = init_params(key)

    out = ae_forward(x, params)
    out = jax.block_until_ready(out)

    ref = ae_reference(x, params)
    assert out.shape == (2, INPUT_DIM), out.shape
    assert out.dtype == jnp.float32, out.dtype
    # bf16 weights/activations in the kernel vs f32 reference: relaxed tolerance.
    assert jnp.allclose(out, ref, atol=2e-2, rtol=2e-2), "mismatch vs reference"

    print("KERNEL_OK")
</pallas_src>

<mosaic_0001>
module attributes {stable_mosaic.version = 11 : i64} {
  func.func @_ae_kernel(%arg0: i32, %arg1: memref<16x784xf32, #tpu.memory_space<vmem>>, %arg2: memref<784x32xbf16, #tpu.memory_space<vmem>>, %arg3: memref<1x32xf32, #tpu.memory_space<vmem>>, %arg4: memref<32x32xbf16, #tpu.memory_space<vmem>>, %arg5: memref<1x32xf32, #tpu.memory_space<vmem>>, %arg6: memref<32x32xbf16, #tpu.memory_space<vmem>>, %arg7: memref<1x32xf32, #tpu.memory_space<vmem>>, %arg8: memref<32x32xbf16, #tpu.memory_space<vmem>>, %arg9: memref<1x32xf32, #tpu.memory_space<vmem>>, %arg10: memref<32x784xbf16, #tpu.memory_space<vmem>>, %arg11: memref<1x784xf32, #tpu.memory_space<vmem>>, %arg12: memref<16x784xf32, #tpu.memory_space<vmem>>) attributes {dimension_semantics = [#tpu.dimension_semantics<parallel>], iteration_bounds = array<i64: 1>, scalar_prefetch = 0 : i64, scratch_operands = 0 : i64, tpu.core_type = #tpu.core_type<tc>, window_params = [{transform_indices = @transform_0, window_bounds = array<i64: 16, 784>}, {pipeline_mode = #tpu.pipeline_mode<synchronous>, transform_indices = @transform_1, window_bounds = array<i64: 784, 32>}, {pipeline_mode = #tpu.pipeline_mode<synchronous>, transform_indices = @transform_2, window_bounds = array<i64: 1, 32>}, {pipeline_mode = #tpu.pipeline_mode<synchronous>, transform_indices = @transform_3, window_bounds = array<i64: 32, 32>}, {pipeline_mode = #tpu.pipeline_mode<synchronous>, transform_indices = @transform_4, window_bounds = array<i64: 1, 32>}, {pipeline_mode = #tpu.pipeline_mode<synchronous>, transform_indices = @transform_5, window_bounds = array<i64: 32, 32>}, {pipeline_mode = #tpu.pipeline_mode<synchronous>, transform_indices = @transform_6, window_bounds = array<i64: 1, 32>}, {pipeline_mode = #tpu.pipeline_mode<synchronous>, transform_indices = @transform_7, window_bounds = array<i64: 32, 32>}, {pipeline_mode = #tpu.pipeline_mode<synchronous>, transform_indices = @transform_8, window_bounds = array<i64: 1, 32>}, {pipeline_mode = #tpu.pipeline_mode<synchronous>, transform_indices = @transform_9, window_bounds = array<i64: 32, 784>}, {pipeline_mode = #tpu.pipeline_mode<synchronous>, transform_indices = @transform_10, window_bounds = array<i64: 1, 784>}, {transform_indices = @transform_11, window_bounds = array<i64: 16, 784>}]} {
    %c0 = arith.constant 0 : index
    %c0_0 = arith.constant 0 : index
    %0 = vector.load %arg1[%c0, %c0_0] : memref<16x784xf32, #tpu.memory_space<vmem>>, vector<16x784xf32>
    %1 = arith.truncf %0 : vector<16x784xf32> to vector<16x784xbf16>
    %c0_1 = arith.constant 0 : index
    %c0_2 = arith.constant 0 : index
    %2 = vector.load %arg2[%c0_1, %c0_2] : memref<784x32xbf16, #tpu.memory_space<vmem>>, vector<784x32xbf16>
    %cst = arith.constant dense<0.000000e+00> : vector<16x32xf32>
    %3 = tpu.matmul %1, %2, %cst {dimension_numbers = #tpu.dot_dimension_numbers<[1], [0], [0], [1], [0, 0, 1, 1], [], []>} : vector<16x784xbf16>, vector<784x32xbf16>, vector<16x32xf32> -> vector<16x32xf32>
    %c0_3 = arith.constant 0 : index
    %c0_4 = arith.constant 0 : index
    %4 = vector.load %arg3[%c0_3, %c0_4] : memref<1x32xf32, #tpu.memory_space<vmem>>, vector<1x32xf32>
    %5 = vector.broadcast %4 : vector<1x32xf32> to vector<16x32xf32>
    %6 = arith.addf %3, %5 : vector<16x32xf32>
    %cst_5 = arith.constant 0.000000e+00 : f32
    %7 = vector.broadcast %cst_5 : f32 to vector<16x32xf32>
    %8 = arith.maximumf %6, %7 : vector<16x32xf32>
    %9 = arith.truncf %8 : vector<16x32xf32> to vector<16x32xbf16>
    %c0_6 = arith.constant 0 : index
    %c0_7 = arith.constant 0 : index
    %10 = vector.load %arg4[%c0_6, %c0_7] : memref<32x32xbf16, #tpu.memory_space<vmem>>, vector<32x32xbf16>
    %cst_8 = arith.constant dense<0.000000e+00> : vector<16x32xf32>
    %11 = tpu.matmul %9, %10, %cst_8 {dimension_numbers = #tpu.dot_dimension_numbers<[1], [0], [0], [1], [0, 0, 1, 1], [], []>} : vector<16x32xbf16>, vector<32x32xbf16>, vector<16x32xf32> -> vector<16x32xf32>
    %c0_9 = arith.constant 0 : index
    %c0_10 = arith.constant 0 : index
    %12 = vector.load %arg5[%c0_9, %c0_10] : memref<1x32xf32, #tpu.memory_space<vmem>>, vector<1x32xf32>
    %13 = vector.broadcast %12 : vector<1x32xf32> to vector<16x32xf32>
    %14 = arith.addf %11, %13 : vector<16x32xf32>
    %cst_11 = arith.constant 0.000000e+00 : f32
    %15 = vector.broadcast %cst_11 : f32 to vector<16x32xf32>
    %16 = arith.maximumf %14, %15 : vector<16x32xf32>
    %17 = arith.truncf %16 : vector<16x32xf32> to vector<16x32xbf16>
    %c0_12 = arith.constant 0 : index
    %c0_13 = arith.constant 0 : index
    %18 = vector.load %arg6[%c0_12, %c0_13] : memref<32x32xbf16, #tpu.memory_space<vmem>>, vector<32x32xbf16>
    %cst_14 = arith.constant dense<0.000000e+00> : vector<16x32xf32>
    %19 = tpu.matmul %17, %18, %cst_14 {dimension_numbers = #tpu.dot_dimension_numbers<[1], [0], [0], [1], [0, 0, 1, 1], [], []>} : vector<16x32xbf16>, vector<32x32xbf16>, vector<16x32xf32> -> vector<16x32xf32>
    %c0_15 = arith.constant 0 : index
    %c0_16 = arith.constant 0 : index
    %20 = vector.load %arg7[%c0_15, %c0_16] : memref<1x32xf32, #tpu.memory_space<vmem>>, vector<1x32xf32>
    %21 = vector.broadcast %20 : vector<1x32xf32> to vector<16x32xf32>
    %22 = arith.addf %19, %21 : vector<16x32xf32>
    %cst_17 = arith.constant 0.000000e+00 : f32
    %23 = vector.broadcast %cst_17 : f32 to vector<16x32xf32>
    %24 = arith.maximumf %22, %23 : vector<16x32xf32>
    %25 = arith.truncf %24 : vector<16x32xf32> to vector<16x32xbf16>
    %c0_18 = arith.constant 0 : index
    %c0_19 = arith.constant 0 : index
    %26 = vector.load %arg8[%c0_18, %c0_19] : memref<32x32xbf16, #tpu.memory_space<vmem>>, vector<32x32xbf16>
    %cst_20 = arith.constant dense<0.000000e+00> : vector<16x32xf32>
    %27 = tpu.matmul %25, %26, %cst_20 {dimension_numbers = #tpu.dot_dimension_numbers<[1], [0], [0], [1], [0, 0, 1, 1], [], []>} : vector<16x32xbf16>, vector<32x32xbf16>, vector<16x32xf32> -> vector<16x32xf32>
    %c0_21 = arith.constant 0 : index
    %c0_22 = arith.constant 0 : index
    %28 = vector.load %arg9[%c0_21, %c0_22] : memref<1x32xf32, #tpu.memory_space<vmem>>, vector<1x32xf32>
    %29 = vector.broadcast %28 : vector<1x32xf32> to vector<16x32xf32>
    %30 = arith.addf %27, %29 : vector<16x32xf32>
    %cst_23 = arith.constant 0.000000e+00 : f32
    %31 = vector.broadcast %cst_23 : f32 to vector<16x32xf32>
    %32 = arith.maximumf %30, %31 : vector<16x32xf32>
    %33 = arith.truncf %32 : vector<16x32xf32> to vector<16x32xbf16>
    %c0_24 = arith.constant 0 : index
    %c0_25 = arith.constant 0 : index
    %34 = vector.load %arg10[%c0_24, %c0_25] : memref<32x784xbf16, #tpu.memory_space<vmem>>, vector<32x784xbf16>
    %cst_26 = arith.constant dense<0.000000e+00> : vector<16x784xf32>
    %35 = tpu.matmul %33, %34, %cst_26 {dimension_numbers = #tpu.dot_dimension_numbers<[1], [0], [0], [1], [0, 0, 1, 1], [], []>} : vector<16x32xbf16>, vector<32x784xbf16>, vector<16x784xf32> -> vector<16x784xf32>
    %c0_27 = arith.constant 0 : index
    %c0_28 = arith.constant 0 : index
    %36 = vector.load %arg11[%c0_27, %c0_28] : memref<1x784xf32, #tpu.memory_space<vmem>>, vector<1x784xf32>
    %37 = vector.broadcast %36 : vector<1x784xf32> to vector<16x784xf32>
    %38 = arith.addf %35, %37 : vector<16x784xf32>
    %39 = math.absf %38 : vector<16x784xf32>
    %cst_29 = arith.constant 0.000000e+00 : f32
    %40 = vector.broadcast %cst_29 : f32 to vector<16x784xf32>
    %41 = arith.subf %40, %39 : vector<16x784xf32>
    %42 = math.exp %41 : vector<16x784xf32>
    %cst_30 = arith.constant 0.000000e+00 : f32
    %43 = vector.broadcast %cst_30 : f32 to vector<16x784xf32>
    %44 = arith.cmpf oge, %38, %43 : vector<16x784xf32>
    %cst_31 = arith.constant 1.000000e+00 : f32
    %45 = vector.broadcast %cst_31 : f32 to vector<16x784xf32>
    %46 = arith.addf %45, %42 : vector<16x784xf32>
    %cst_32 = arith.constant 1.000000e+00 : f32
    %47 = vector.broadcast %cst_32 : f32 to vector<16x784xf32>
    %48 = arith.divf %47, %46 : vector<16x784xf32>
    %cst_33 = arith.constant 1.000000e+00 : f32
    %49 = vector.broadcast %cst_33 : f32 to vector<16x784xf32>
    %50 = arith.addf %49, %42 : vector<16x784xf32>
    %51 = arith.divf %42, %50 : vector<16x784xf32>
    %52 = arith.select %44, %48, %51 : vector<16x784xi1>, vector<16x784xf32>
    %c0_34 = arith.constant 0 : index
    %c0_35 = arith.constant 0 : index
    %53 = vector.load %arg12[%c0_34, %c0_35] : memref<16x784xf32, #tpu.memory_space<vmem>>, vector<16x784xf32>
    tpu.vector_store %arg12[%c0_34, %c0_35], %52 {strides = array<i32>} : memref<16x784xf32, #tpu.memory_space<vmem>>, vector<16x784xf32>,
    return
  }
  func.func @transform_0(%arg0: i32) -> (i32, i32) {
    %c0_i32 = arith.constant 0 : i32
    %c0_i32_0 = arith.constant 0 : i32
    return %arg0, %c0_i32 : i32, i32
  }
  func.func @transform_1(%arg0: i32) -> (i32, i32) {
    %c0_i32 = arith.constant 0 : i32
    %c0_i32_0 = arith.constant 0 : i32
    %c0_i32_1 = arith.constant 0 : i32
    return %c0_i32, %c0_i32_0 : i32, i32
  }
  func.func @transform_2(%arg0: i32) -> (i32, i32) {
    %c0_i32 = arith.constant 0 : i32
    %c0_i32_0 = arith.constant 0 : i32
    %c0_i32_1 = arith.constant 0 : i32
    return %c0_i32, %c0_i32_0 : i32, i32
  }
  func.func @transform_3(%arg0: i32) -> (i32, i32) {
    %c0_i32 = arith.constant 0 : i32
    %c0_i32_0 = arith.constant 0 : i32
    %c0_i32_1 = arith.constant 0 : i32
    return %c0_i32, %c0_i32_0 : i32, i32
  }
  func.func @transform_4(%arg0: i32) -> (i32, i32) {
    %c0_i32 = arith.constant 0 : i32
    %c0_i32_0 = arith.constant 0 : i32
    %c0_i32_1 = arith.constant 0 : i32
    return %c0_i32, %c0_i32_0 : i32, i32
  }
  func.func @transform_5(%arg0: i32) -> (i32, i32) {
    %c0_i32 = arith.constant 0 : i32
    %c0_i32_0 = arith.constant 0 : i32
    %c0_i32_1 = arith.constant 0 : i32
    return %c0_i32, %c0_i32_0 : i32, i32
  }
  func.func @transform_6(%arg0: i32) -> (i32, i32) {
    %c0_i32 = arith.constant 0 : i32
    %c0_i32_0 = arith.constant 0 : i32
    %c0_i32_1 = arith.constant 0 : i32
    return %c0_i32, %c0_i32_0 : i32, i32
  }
  func.func @transform_7(%arg0: i32) -> (i32, i32) {
    %c0_i32 = arith.constant 0 : i32
    %c0_i32_0 = arith.constant 0 : i32
    %c0_i32_1 = arith.constant 0 : i32
    return %c0_i32, %c0_i32_0 : i32, i32
  }
  func.func @transform_8(%arg0: i32) -> (i32, i32) {
    %c0_i32 = arith.constant 0 : i32
    %c0_i32_0 = arith.constant 0 : i32
    %c0_i32_1 = arith.constant 0 : i32
    return %c0_i32, %c0_i32_0 : i32, i32
  }
  func.func @transform_9(%arg0: i32) -> (i32, i32) {
    %c0_i32 = arith.constant 0 : i32
    %c0_i32_0 = arith.constant 0 : i32
    %c0_i32_1 = arith.constant 0 : i32
    return %c0_i32, %c0_i32_0 : i32, i32
  }
  func.func @transform_10(%arg0: i32) -> (i32, i32) {
    %c0_i32 = arith.constant 0 : i32
    %c0_i32_0 = arith.constant 0 : i32
    %c0_i32_1 = arith.constant 0 : i32
    return %c0_i32, %c0_i32_0 : i32, i32
  }
  func.func @transform_11(%arg0: i32) -> (i32, i32) {
    %c0_i32 = arith.constant 0 : i32
    %c0_i32_0 = arith.constant 0 : i32
    return %arg0, %c0_i32 : i32, i32
  }
}

</mosaic_0001>

<llo_original>
// kernel: tpu_custom_call.1
$region0: #{tpu_custom_call.1}
  #allocation0 [shape = 'u32[]', space=smem, size = 0x4, offset = 0x4, fixed_abs, tag = 'smem constant byte address 0x4 - core index']
  #allocation1 [shape = 'u32[144,128]{1,0:T(1,128)}', space=vmem, size = 0x12000, scoped, tag = 'internal scratch']
  %s0 = inlined_call_operand.vmem [shape: f32[16,784], index: 0, kind: input, shape index: {}]
  %s1 = inlined_call_operand.vmem [shape: bf16[784,32], index: 1, kind: input, shape index: {}]
  %s2 = inlined_call_operand.vmem [shape: f32[1,32], index: 2, kind: input, shape index: {}]
  %s3 = inlined_call_operand.vmem [shape: bf16[32,32], index: 3, kind: input, shape index: {}]
  %s4 = inlined_call_operand.vmem [shape: f32[1,32], index: 4, kind: input, shape index: {}]
  %s5 = inlined_call_operand.vmem [shape: bf16[32,32], index: 5, kind: input, shape index: {}]
  %s6 = inlined_call_operand.vmem [shape: f32[1,32], index: 6, kind: input, shape index: {}]
  %s7 = inlined_call_operand.vmem [shape: bf16[32,32], index: 7, kind: input, shape index: {}]
  %s8 = inlined_call_operand.vmem [shape: f32[1,32], index: 8, kind: input, shape index: {}]
  %s9 = inlined_call_operand.vmem [shape: bf16[32,784], index: 9, kind: input, shape index: {}]
  %s10 = inlined_call_operand.vmem [shape: f32[1,784], index: 10, kind: input, shape index: {}]
  %s11 = inlined_call_operand.hbm [shape: f32[16,784], index: 11, kind: output, shape index: {}]
  %s12 = sld [smem:[#allocation0]]
  $region54: #{tpu_custom_call.1} parent=0
    _
  %s14 = ssub.s32 1, %s12
  %s15 = scalar_select 0, %s14, %s12
  $region1: #{tpu_custom_call.1} parent=0
    #allocation2 [shape = 'u8[57344]{0}', space=vmem, size = 0xe000, scoped, tag = 'output window, operand 0, single buffered']
    #allocation3 [shape = 's32[1]{0}', space=sflag, size = 0x4, scoped, tag = 'scoped memory for tpu_custom_call.1']
    %16 = vsyncpa [#allocation3], 0
    // Predicated region
    $region2: #{tpu_custom_call.1} parent=1 // pred_check
      _
    $region3: #{tpu_custom_call.1} parent=1 // pred_check_branch
      %18 = sbr.rel (0) target = $region5
    $region4: #{tpu_custom_call.1} parent=1 // pred_region
      _
    $region5: #{tpu_custom_call.1} parent=1 // pred_fallthru
      _
    // Predicated region
    $region6: #{tpu_custom_call.1} parent=1 // pred_check
      _
    $region7: #{tpu_custom_call.1} parent=1 // pred_check_branch
      %20 = sbr.rel (0) target = $region9
    $region8: #{tpu_custom_call.1} parent=1 // pred_region
      _
    $region9: #{tpu_custom_call.1} parent=1 // pred_fallthru
      _
    // Predicated region
    $region10: #{tpu_custom_call.1} parent=1 // pred_check
      _
    $region11: #{tpu_custom_call.1} parent=1 // pred_check_branch
      %22 = sbr.rel (0) target = $region13
    $region12: #{tpu_custom_call.1} parent=1 // pred_region
      _
    $region13: #{tpu_custom_call.1} parent=1 // pred_fallthru
      _
    // Predicated region
    $region14: #{tpu_custom_call.1} parent=1 // pred_check
      _
    $region15: #{tpu_custom_call.1} parent=1 // pred_check_branch
      %24 = sbr.rel (0) target = $region17
    $region16: #{tpu_custom_call.1} parent=1 // pred_region
      _
    $region17: #{tpu_custom_call.1} parent=1 // pred_fallthru
      _
    // Predicated region
    $region18: #{tpu_custom_call.1} parent=1 // pred_check
      _
    $region19: #{tpu_custom_call.1} parent=1 // pred_check_branch
      %26 = sbr.rel (0) target = $region21
    $region20: #{tpu_custom_call.1} parent=1 // pred_region
      _
    $region21: #{tpu_custom_call.1} parent=1 // pred_fallthru
      _
    // Predicated region
    $region22: #{tpu_custom_call.1} parent=1 // pred_check
      _
    $region23: #{tpu_custom_call.1} parent=1 // pred_check_branch
      %28 = sbr.rel (0) target = $region25
    $region24: #{tpu_custom_call.1} parent=1 // pred_region
      _
    $region25: #{tpu_custom_call.1} parent=1 // pred_fallthru
      _
    // Predicated region
    $region26: #{tpu_custom_call.1} parent=1 // pred_check
      _
    $region27: #{tpu_custom_call.1} parent=1 // pred_check_branch
      %30 = sbr.rel (0) target = $region29
    $region28: #{tpu_custom_call.1} parent=1 // pred_region
      _
    $region29: #{tpu_custom_call.1} parent=1 // pred_fallthru
      _
    // Predicated region
    $region30: #{tpu_custom_call.1} parent=1 // pred_check
      _
    $region31: #{tpu_custom_call.1} parent=1 // pred_check_branch
      %32 = sbr.rel (0) target = $region33
    $region32: #{tpu_custom_call.1} parent=1 // pred_region
      _
    $region33: #{tpu_custom_call.1} parent=1 // pred_fallthru
      _
    // Predicated region
    $region34: #{tpu_custom_call.1} parent=1 // pred_check
      _
    $region35: #{tpu_custom_call.1} parent=1 // pred_check_branch
      %34 = sbr.rel (0) target = $region37
    $region36: #{tpu_custom_call.1} parent=1 // pred_region
      _
    $region37: #{tpu_custom_call.1} parent=1 // pred_fallthru
      _
    // Predicated region
    $region38: #{tpu_custom_call.1} parent=1 // pred_check
      _
    $region39: #{tpu_custom_call.1} parent=1 // pred_check_branch
      %36 = sbr.rel (0) target = $region41
    $region40: #{tpu_custom_call.1} parent=1 // pred_region
      _
    $region41: #{tpu_custom_call.1} parent=1 // pred_fallthru
      _
    // Predicated region
    $region42: #{tpu_custom_call.1} parent=1 // pred_check
      _
    $region43: #{tpu_custom_call.1} parent=1 // pred_check_branch
      %38 = sbr.rel (0) target = $region45
    $region44: #{tpu_custom_call.1} parent=1 // pred_region
      _
    $region45: #{tpu_custom_call.1} parent=1 // pred_fallthru
      _
    %v40 = vld [vmem:[%s0] sm:$0xff]
    %v41 = vld [vmem:[%s0 + $0x8] sm:$0xff]
    %v42 = vld [vmem:[%s0 + $0x10] sm:$0xff]
    %v43 = vld [vmem:[%s0 + $0x18] sm:$0xff]
    %v44 = vld [vmem:[%s0 + $0x20] sm:$0xff]
    %v45 = vld [vmem:[%s0 + $0x28] sm:$0xff]
    %v46 = vld [vmem:[%s0 + $0x30] sm:$0xff]
    %v47 = vld [vmem:[%s0 + $0x38] sm:$0xff]
    %v48 = vld [vmem:[%s0 + $0x40] sm:$0xff]
    %v49 = vld [vmem:[%s0 + $0x48] sm:$0xff]
    %v50 = vld [vmem:[%s0 + $0x50] sm:$0xff]
    %v51 = vld [vmem:[%s0 + $0x58] sm:$0xff]
    %v52 = vld [vmem:[%s0 + $0x60] sm:$0xff]
    %v53 = vld [vmem:[%s0 + $0x68] sm:$0xff]
    %v54 = vpack.c.bf16 %v47, %v40
    %v55 = vpack.c.bf16 %v48, %v41
    %v56 = vpack.c.bf16 %v49, %v42
    %v57 = vpack.c.bf16 %v50, %v43
    %v58 = vpack.c.bf16 %v51, %v44
    %v59 = vpack.c.bf16 %v52, %v45
    %v60 = vpack.c.bf16 %v53, %v46
    %v61 = vld [vmem:[%s1] sm:$0xf]
    %v62 = vld [vmem:[%s1 + $0x4] sm:$0xf]
    %v63 = vld [vmem:[%s1 + $0x8] sm:$0xf]
    %v64 = vld [vmem:[%s1 + $0xc] sm:$0xf]
    %v65 = vld [vmem:[%s1 + $0x10] sm:$0xf]
    %v66 = vld [vmem:[%s1 + $0x14] sm:$0xf]
    %v67 = vld [vmem:[%s1 + $0x18] sm:$0xf]
    %v68 = vld [vmem:[%s1 + $0x1c] sm:$0xf]
    %v69 = vld [vmem:[%s1 + $0x20] sm:$0xf]
    %v70 = vld [vmem:[%s1 + $0x24] sm:$0xf]
    %v71 = vld [vmem:[%s1 + $0x28] sm:$0xf]
    %v72 = vld [vmem:[%s1 + $0x2c] sm:$0xf]
    %v73 = vld [vmem:[%s1 + $0x30] sm:$0xf]
    %v74 = vld [vmem:[%s1 + $0x34] sm:$0xf]
    %v75 = vld [vmem:[%s1 + $0x38] sm:$0xf]
    %v76 = vld [vmem:[%s1 + $0x3c] sm:$0xf]
    %v77 = vld [vmem:[%s1 + $0x40] sm:$0xf]
    %v78 = vld [vmem:[%s1 + $0x44] sm:$0xf]
    %v79 = vld [vmem:[%s1 + $0x48] sm:$0xf]
    %v80 = vld [vmem:[%s1 + $0x4c] sm:$0xf]
    %v81 = vld [vmem:[%s1 + $0x50] sm:$0xf]
    %v82 = vld [vmem:[%s1 + $0x54] sm:$0xf]
    %v83 = vld [vmem:[%s1 + $0x58] sm:$0xf]
    %v84 = vld [vmem:[%s1 + $0x5c] sm:$0xf]
    %v85 = vld [vmem:[%s1 + $0x60] sm:$0xf]
    %v86 = vld [vmem:[%s1 + $0x64] sm:$0xf]
    %v87 = vld [vmem:[%s1 + $0x68] sm:$0xf]
    %v88 = vld [vmem:[%s1 + $0x6c] sm:$0xf]
    %v89 = vld [vmem:[%s1 + $0x70] sm:$0xf]
    %v90 = vld [vmem:[%s1 + $0x74] sm:$0xf]
    %v91 = vld [vmem:[%s1 + $0x78] sm:$0xf]
    %v92 = vld [vmem:[%s1 + $0x7c] sm:$0xf]
    %v93 = vld [vmem:[%s1 + $0x80] sm:$0xf]
    %v94 = vld [vmem:[%s1 + $0x84] sm:$0xf]
    %v95 = vld [vmem:[%s1 + $0x88] sm:$0xf]
    %v96 = vld [vmem:[%s1 + $0x8c] sm:$0xf]
    %v97 = vld [vmem:[%s1 + $0x90] sm:$0xf]
    %v98 = vld [vmem:[%s1 + $0x94] sm:$0xf]
    %v99 = vld [vmem:[%s1 + $0x98] sm:$0xf]
    %v100 = vld [vmem:[%s1 + $0x9c] sm:$0xf]
    %v101 = vld [vmem:[%s1 + $0xa0] sm:$0xf]
    %v102 = vld [vmem:[%s1 + $0xa4] sm:$0xf]
    %v103 = vld [vmem:[%s1 + $0xa8] sm:$0xf]
    %v104 = vld [vmem:[%s1 + $0xac] sm:$0xf]
    %v105 = vld [vmem:[%s1 + $0xb0] sm:$0xf]
    %v106 = vld [vmem:[%s1 + $0xb4] sm:$0xf]
    %v107 = vld [vmem:[%s1 + $0xb8] sm:$0xf]
    %v108 = vld [vmem:[%s1 + $0xbc] sm:$0xf]
    %v109 = vld [vmem:[%s1 + $0xc0] sm:$0xf]
    %v110 = vld [vmem:[%s1 + $0xc4] sm:$0xf]
    %v111 = vld [vmem:[%s1 + $0xc8] sm:$0xf]
    %v112 = vld [vmem:[%s1 + $0xcc] sm:$0xf]
    %v113 = vld [vmem:[%s1 + $0xd0] sm:$0xf]
    %v114 = vld [vmem:[%s1 + $0xd4] sm:$0xf]
    %v115 = vld [vmem:[%s1 + $0xd8] sm:$0xf]
    %v116 = vld [vmem:[%s1 + $0xdc] sm:$0xf]
    %v117 = vld [vmem:[%s1 + $0xe0] sm:$0xf]
    %v118 = vld [vmem:[%s1 + $0xe4] sm:$0xf]
    %v119 = vld [vmem:[%s1 + $0xe8] sm:$0xf]
    %v120 = vld [vmem:[%s1 + $0xec] sm:$0xf]
    %v121 = vld [vmem:[%s1 + $0xf0] sm:$0xf]
    %v122 = vld [vmem:[%s1 + $0xf4] sm:$0xf]
    %v123 = vld [vmem:[%s1 + $0xf8] sm:$0xf]
    %v124 = vld [vmem:[%s1 + $0xfc] sm:$0xf]
    %v125 = vld [vmem:[%s1 + $0x100] sm:$0xf]
    %v126 = vld [vmem:[%s1 + $0x104] sm:$0xf]
    %v127 = vld [vmem:[%s1 + $0x108] sm:$0xf]
    %v128 = vld [vmem:[%s1 + $0x10c] sm:$0xf]
    %v129 = vld [vmem:[%s1 + $0x110] sm:$0xf]
    %v130 = vld [vmem:[%s1 + $0x114] sm:$0xf]
    %v131 = vld [vmem:[%s1 + $0x118] sm:$0xf]
    %v132 = vld [vmem:[%s1 + $0x11c] sm:$0xf]
    %v133 = vld [vmem:[%s1 + $0x120] sm:$0xf]
    %v134 = vld [vmem:[%s1 + $0x124] sm:$0xf]
    %v135 = vld [vmem:[%s1 + $0x128] sm:$0xf]
    %v136 = vld [vmem:[%s1 + $0x12c] sm:$0xf]
    %v137 = vld [vmem:[%s1 + $0x130] sm:$0xf]
    %v138 = vld [vmem:[%s1 + $0x134] sm:$0xf]
    %v139 = vld [vmem:[%s1 + $0x138] sm:$0xf]
    %v140 = vld [vmem:[%s1 + $0x13c] sm:$0xf]
    %v141 = vld [vmem:[%s1 + $0x140] sm:$0xf]
    %v142 = vld [vmem:[%s1 + $0x144] sm:$0xf]
    %v143 = vld [vmem:[%s1 + $0x148] sm:$0xf]
    %v144 = vld [vmem:[%s1 + $0x14c] sm:$0xf]
    %v145 = vld [vmem:[%s1 + $0x150] sm:$0xf]
    %v146 = vld [vmem:[%s1 + $0x154] sm:$0xf]
    %v147 = vld [vmem:[%s1 + $0x158] sm:$0xf]
    %v148 = vld [vmem:[%s1 + $0x15c] sm:$0xf]
    %v149 = vld [vmem:[%s1 + $0x160] sm:$0xf]
    %v150 = vld [vmem:[%s1 + $0x164] sm:$0xf]
    %v151 = vld [vmem:[%s1 + $0x168] sm:$0xf]
    %v152 = vld [vmem:[%s1 + $0x16c] sm:$0xf]
    %v153 = vld [vmem:[%s1 + $0x170] sm:$0xf]
    %v154 = vld [vmem:[%s1 + $0x174] sm:$0xf]
    %v155 = vld [vmem:[%s1 + $0x178] sm:$0xf]
    %v156 = vld [vmem:[%s1 + $0x17c] sm:$0xf]
    %v157 = vld [vmem:[%s1 + $0x180] sm:$0xf]
    %v158 = vld [vmem:[%s1 + $0x184] sm:$0xf]
    %v159 = vld [vmem:[%s2] sm:$0x1]
    %v161 = vlaneseq
    %v162 = vshrl.u32 %v161, 7
    %v163 = vsub.s32 0, %v162
    %v164 = vrot.slane %v159, %v163
    %v264 = vunpack.c.l.b16 %v61
    %v265 = vunpack.c.l.b16 %v62
    %v266 = vunpack.c.l.b16 %v63
    %v267 = vunpack.c.l.b16 %v64
    %v268 = vunpack.c.l.b16 %v65
    %v269 = vunpack.c.l.b16 %v66
    %v270 = vunpack.c.l.b16 %v67
    %v271 = vunpack.c.l.b16 %v68
    %v272 = vunpack.c.l.b16 %v69
    %v273 = vunpack.c.l.b16 %v70
    %v274 = vunpack.c.l.b16 %v71
    %v275 = vunpack.c.l.b16 %v72
    %v276 = vunpack.c.l.b16 %v73
    %v277 = vunpack.c.l.b16 %v74
    %v278 = vunpack.c.l.b16 %v75
    %v279 = vunpack.c.l.b16 %v76
    %v280 = vunpack.c.l.b16 %v77
    %v281 = vunpack.c.l.b16 %v78
    %v282 = vunpack.c.l.b16 %v79
    %v283 = vunpack.c.l.b16 %v80
    %v284 = vunpack.c.l.b16 %v81
    %v285 = vunpack.c.l.b16 %v82
    %v286 = vunpack.c.l.b16 %v83
    %v287 = vunpack.c.l.b16 %v84
    %v288 = vunpack.c.l.b16 %v85
    %v289 = vunpack.c.l.b16 %v86
    %v290 = vunpack.c.l.b16 %v87
    %v291 = vunpack.c.l.b16 %v88
    %v292 = vunpack.c.l.b16 %v89
    %v293 = vunpack.c.l.b16 %v90
    %v294 = vunpack.c.l.b16 %v91
    %v295 = vunpack.c.l.b16 %v92
    %v296 = vunpack.c.l.b16 %v93
    %v297 = vunpack.c.l.b16 %v94
    %v298 = vunpack.c.l.b16 %v95
    %v299 = vunpack.c.l.b16 %v96
    %v300 = vunpack.c.l.b16 %v97
    %v301 = vunpack.c.l.b16 %v98
    %v302 = vunpack.c.l.b16 %v99
    %v303 = vunpack.c.l.b16 %v100
    %v304 = vunpack.c.l.b16 %v101
    %v305 = vunpack.c.l.b16 %v102
    %v306 = vunpack.c.l.b16 %v103
    %v307 = vunpack.c.l.b16 %v104
    %v308 = vunpack.c.l.b16 %v105
    %v309 = vunpack.c.l.b16 %v106
    %v310 = vunpack.c.l.b16 %v107
    %v311 = vunpack.c.l.b16 %v108
    %v312 = vunpack.c.l.b16 %v109
    %v313 = vunpack.c.l.b16 %v110
    %v314 = vunpack.c.l.b16 %v111
    %v315 = vunpack.c.l.b16 %v112
    %v316 = vunpack.c.l.b16 %v113
    %v317 = vunpack.c.l.b16 %v114
    %v318 = vunpack.c.l.b16 %v115
    %v319 = vunpack.c.l.b16 %v116
    %v320 = vunpack.c.l.b16 %v117
    %v321 = vunpack.c.l.b16 %v118
    %v322 = vunpack.c.l.b16 %v119
    %v323 = vunpack.c.l.b16 %v120
    %v324 = vunpack.c.l.b16 %v121
    %v325 = vunpack.c.l.b16 %v122
    %v326 = vunpack.c.l.b16 %v123
    %v327 = vunpack.c.l.b16 %v124
    %v328 = vunpack.c.l.b16 %v125
    %v329 = vunpack.c.l.b16 %v126
    %v330 = vunpack.c.l.b16 %v127
    %v331 = vunpack.c.l.b16 %v128
    %v332 = vunpack.c.l.b16 %v129
    %v333 = vunpack.c.l.b16 %v130
    %v334 = vunpack.c.l.b16 %v131
    %v335 = vunpack.c.l.b16 %v132
    %v336 = vunpack.c.l.b16 %v133
    %v337 = vunpack.c.l.b16 %v134
    %v338 = vunpack.c.l.b16 %v135
    %v339 = vunpack.c.l.b16 %v136
    %v340 = vunpack.c.l.b16 %v137
    %v341 = vunpack.c.l.b16 %v138
    %v342 = vunpack.c.l.b16 %v139
    %v343 = vunpack.c.l.b16 %v140
    %v344 = vunpack.c.l.b16 %v141
    %v345 = vunpack.c.l.b16 %v142
    %v346 = vunpack.c.l.b16 %v143
    %v347 = vunpack.c.l.b16 %v144
    %v348 = vunpack.c.l.b16 %v145
    %v349 = vunpack.c.l.b16 %v146
    %v350 = vunpack.c.l.b16 %v147
    %v351 = vunpack.c.l.b16 %v148
    %v352 = vunpack.c.l.b16 %v149
    %v353 = vunpack.c.l.b16 %v150
    %v354 = vunpack.c.l.b16 %v151
    %v355 = vunpack.c.l.b16 %v152
    %v356 = vunpack.c.l.b16 %v153
    %v357 = vunpack.c.l.b16 %v154
    %v358 = vunpack.c.l.b16 %v155
    %v359 = vunpack.c.l.b16 %v156
    %v360 = vunpack.c.l.b16 %v157
    %v361 = vunpack.c.l.b16 %v158
    %v362 = vpack.c.b16 %v265, %v264
    %v363 = vpack.c.b16 %v267, %v266
    %v364 = vpack.c.b16 %v269, %v268
    %v365 = vpack.c.b16 %v271, %v270
    %v366 = vpack.c.b16 %v273, %v272
    %v367 = vpack.c.b16 %v275, %v274
    %v368 = vpack.c.b16 %v277, %v276
    %v369 = vpack.c.b16 %v279, %v278
    %v370 = vpack.c.b16 %v281, %v280
    %v371 = vpack.c.b16 %v283, %v282
    %v372 = vpack.c.b16 %v285, %v284
    %v373 = vpack.c.b16 %v287, %v286
    %v374 = vpack.c.b16 %v289, %v288
    %v375 = vpack.c.b16 %v291, %v290
    %v376 = vpack.c.b16 %v293, %v292
    %v377 = vpack.c.b16 %v295, %v294
    %v378 = vpack.c.b16 %v297, %v296
    %v379 = vpack.c.b16 %v299, %v298
    %v380 = vpack.c.b16 %v301, %v300
    %v381 = vpack.c.b16 %v303, %v302
    %v382 = vpack.c.b16 %v305, %v304
    %v383 = vpack.c.b16 %v307, %v306
    %v384 = vpack.c.b16 %v309, %v308
    %v385 = vpack.c.b16 %v311, %v310
    %v386 = vpack.c.b16 %v313, %v312
    %v387 = vpack.c.b16 %v315, %v314
    %v388 = vpack.c.b16 %v317, %v316
    %v389 = vpack.c.b16 %v319, %v318
    %v390 = vpack.c.b16 %v321, %v320
    %v391 = vpack.c.b16 %v323, %v322
    %v392 = vpack.c.b16 %v325, %v324
    %v393 = vpack.c.b16 %v327, %v326
    %v394 = vpack.c.b16 %v329, %v328
    %v395 = vpack.c.b16 %v331, %v330
    %v396 = vpack.c.b16 %v333, %v332
    %v397 = vpack.c.b16 %v335, %v334
    %v398 = vpack.c.b16 %v337, %v336
    %v399 = vpack.c.b16 %v339, %v338
    %v400 = vpack.c.b16 %v341, %v340
    %v401 = vpack.c.b16 %v343, %v342
    %v402 = vpack.c.b16 %v345, %v344
    %v403 = vpack.c.b16 %v347, %v346
    %v404 = vpack.c.b16 %v349, %v348
    %v405 = vpack.c.b16 %v351, %v350
    %v406 = vpack.c.b16 %v353, %v352
    %v407 = vpack.c.b16 %v355, %v354
    %v408 = vpack.c.b16 %v357, %v356
    %v409 = vpack.c.b16 %v359, %v358
    %v410 = vpack.c.b16 %v361, %v360
    %vm460 = vcmask 130048
    %v462 = vsel %vm460, %v60, 0
    %464 = vmatprep.subr.bf16.mxu0 0
    %465 = vmatpush1.bf16.msra.mxu0 %v369
    %466 = vmatprep.subr.bf16.mxu0 0
    %467 = vmatpush1.bf16.msra.mxu0 %v368
    %468 = vmatprep.subr.bf16.mxu0 0
    %469 = vmatpush1.bf16.msra.mxu0 %v367
    %470 = vmatprep.subr.bf16.mxu0 0
    %471 = vmatpush1.bf16.msra.mxu0 %v366
    %472 = vmatprep.subr.bf16.mxu0 0
    %473 = vmatpush1.bf16.msra.mxu0 %v365
    %474 = vmatprep.subr.bf16.mxu0 0
    %475 = vmatpush1.bf16.msra.mxu0 %v364
    %476 = vmatprep.subr.bf16.mxu0 0
    %477 = vmatpush1.bf16.msra.mxu0 %v363
    %478 = vmatprep.subr.bf16.mxu0 0
    %479 = vmatpush1.bf16.msra.mxu0 %v362
    %480 = vmatprep.subr.bf16.mxu0 0
    %481 = vmatpush2.bf16.msra.mxu0 %v377
    %482 = vmatprep.subr.bf16.mxu0 0
    %483 = vmatpush2.bf16.msra.mxu0 %v376
    %484 = vmatprep.subr.bf16.mxu0 0
    %485 = vmatpush2.bf16.msra.mxu0 %v375
    %486 = vmatprep.subr.bf16.mxu0 0
    %487 = vmatpush2.bf16.msra.mxu0 %v374
    %488 = vmatprep.subr.bf16.mxu0 0
    %489 = vmatpush2.bf16.msra.mxu0 %v373
    %490 = vmatprep.subr.bf16.mxu0 0
    %491 = vmatpush2.bf16.msra.mxu0 %v372
    %492 = vmatprep.subr.bf16.mxu0 0
    %493 = vmatpush2.bf16.msra.mxu0 %v371
    %494 = vmatprep.subr.bf16.mxu0 0
    %495 = vmatpush2.bf16.msra.mxu0 %v370
    %496 = vmatprep.mubr.bf16.mxu0 %v55
    %497 = vmatmul.mubr.bf16.gmra.mxu0 %v54
    %v498 = vpop.f32.mrf.mxu0
    %v499 = vadd.f32 %v164, %v498
    %v500 = vpop.f32.mrf.mxu0
    %v501 = vpop.f32.mrf.mxu0
    %v502 = vadd.f32 %v164, %v501
    %v503 = vpop.f32.mrf.mxu0
    %504 = vdwg.mxu0
    %505 = vmatprep.subr.bf16.mxu0 0
    %506 = vmatpush1.bf16.msra.mxu0 %v385
    %507 = vmatprep.subr.bf16.mxu0 0
    %508 = vmatpush1.bf16.msra.mxu0 %v384
    %509 = vmatprep.subr.bf16.mxu0 0
    %510 = vmatpush1.bf16.msra.mxu0 %v383
    %511 = vmatprep.subr.bf16.mxu0 0
    %512 = vmatpush1.bf16.msra.mxu0 %v382
    %513 = vmatprep.subr.bf16.mxu0 0
    %514 = vmatpush1.bf16.msra.mxu0 %v381
    %515 = vmatprep.subr.bf16.mxu0 0
    %516 = vmatpush1.bf16.msra.mxu0 %v380
    %517 = vmatprep.subr.bf16.mxu0 0
    %518 = vmatpush1.bf16.msra.mxu0 %v379
    %519 = vmatprep.subr.bf16.mxu0 0
    %520 = vmatpush1.bf16.msra.mxu0 %v378
    %521 = vmatprep.subr.bf16.mxu0 0
    %522 = vmatpush2.bf16.msra.mxu0 %v393
    %523 = vmatprep.subr.bf16.mxu0 0
    %524 = vmatpush2.bf16.msra.mxu0 %v392
    %525 = vmatprep.subr.bf16.mxu0 0
    %526 = vmatpush2.bf16.msra.mxu0 %v391
    %527 = vmatprep.subr.bf16.mxu0 0
    %528 = vmatpush2.bf16.msra.mxu0 %v390
    %529 = vmatprep.subr.bf16.mxu0 0
    %530 = vmatpush2.bf16.msra.mxu0 %v389
    %531 = vmatprep.subr.bf16.mxu0 0
    %532 = vmatpush2.bf16.msra.mxu0 %v388
    %533 = vmatprep.subr.bf16.mxu0 0
    %534 = vmatpush2.bf16.msra.mxu0 %v387
    %535 = vmatprep.subr.bf16.mxu0 0
    %536 = vmatpush2.bf16.msra.mxu0 %v386
    %537 = vmatprep.mubr.bf16.mxu0 %v57
    %538 = vmatmul.mubr.bf16.gmra.mxu0 %v56
    %v539 = vpop.f32.mrf.mxu0
    %v540 = vadd.f32 %v499, %v539
    %v541 = vpop.f32.mrf.mxu0
    %v542 = vpop.f32.mrf.mxu0
    %v543 = vadd.f32 %v502, %v542
    %v544 = vpop.f32.mrf.mxu0
    %545 = vdwg.mxu0
    %546 = vmatprep.subr.bf16.mxu0 0
    %547 = vmatpush1.bf16.msra.mxu0 %v401
    %548 = vmatprep.subr.bf16.mxu0 0
    %549 = vmatpush1.bf16.msra.mxu0 %v400
    %550 = vmatprep.subr.bf16.mxu0 0
    %551 = vmatpush1.bf16.msra.mxu0 %v399
    %552 = vmatprep.subr.bf16.mxu0 0
    %553 = vmatpush1.bf16.msra.mxu0 %v398
    %554 = vmatprep.subr.bf16.mxu0 0
    %555 = vmatpush1.bf16.msra.mxu0 %v397
    %556 = vmatprep.subr.bf16.mxu0 0
    %557 = vmatpush1.bf16.msra.mxu0 %v396
    %558 = vmatprep.subr.bf16.mxu0 0
    %559 = vmatpush1.bf16.msra.mxu0 %v395
    %560 = vmatprep.subr.bf16.mxu0 0
    %561 = vmatpush1.bf16.msra.mxu0 %v394
    %562 = vmatprep.subr.bf16.mxu0 0
    %563 = vmatpush2.bf16.msra.mxu0 %v409
    %564 = vmatprep.subr.bf16.mxu0 0
    %565 = vmatpush2.bf16.msra.mxu0 %v408
    %566 = vmatprep.subr.bf16.mxu0 0
    %567 = vmatpush2.bf16.msra.mxu0 %v407
    %568 = vmatprep.subr.bf16.mxu0 0
    %569 = vmatpush2.bf16.msra.mxu0 %v406
    %570 = vmatprep.subr.bf16.mxu0 0
    %571 = vmatpush2.bf16.msra.mxu0 %v405
    %572 = vmatprep.subr.bf16.mxu0 0
    %573 = vmatpush2.bf16.msra.mxu0 %v404
    %574 = vmatprep.subr.bf16.mxu0 0
    %575 = vmatpush2.bf16.msra.mxu0 %v403
    %576 = vmatprep.subr.bf16.mxu0 0
    %577 = vmatpush2.bf16.msra.mxu0 %v402
    %578 = vmatprep.mubr.bf16.mxu0 %v59
    %579 = vmatmul.mubr.bf16.gmra.mxu0 %v58
    %v580 = vpop.f32.mrf.mxu0
    %v581 = vadd.f32 %v540, %v580
    %v582 = vpop.f32.mrf.mxu0
    %v583 = vpop.f32.mrf.mxu0
    %v584 = vadd.f32 %v543, %v583
    %v585 = vpop.f32.mrf.mxu0
    %586 = vdwg.mxu0
    %587 = vmatprep.subr.bf16.mxu0 0
    %588 = vmatpush1.bf16.msra.mxu0 0
    %589 = vmatprep.subr.bf16.mxu0 0
    %590 = vmatpush1.bf16.msra.mxu0 0
    %591 = vmatprep.subr.bf16.mxu0 0
    %592 = vmatpush1.bf16.msra.mxu0 0
    %593 = vmatprep.subr.bf16.mxu0 0
    %594 = vmatpush1.bf16.msra.mxu0 0
    %595 = vmatprep.subr.bf16.mxu0 0
    %596 = vmatpush1.bf16.msra.mxu0 0
    %597 = vmatprep.subr.bf16.mxu0 0
    %598 = vmatpush1.bf16.msra.mxu0 0
    %599 = vmatprep.subr.bf16.mxu0 0
    %600 = vmatpush1.bf16.msra.mxu0 0
    %601 = vmatprep.subr.bf16.mxu0 0
    %602 = vmatpush1.bf16.msra.mxu0 %v410
    %603 = vmatprep.subr.bf16.mxu0 0
    %604 = vmatpush2.bf16.msra.mxu0 0
    %605 = vmatprep.subr.bf16.mxu0 0
    %606 = vmatpush2.bf16.msra.mxu0 0
    %607 = vmatprep.subr.bf16.mxu0 0
    %608 = vmatpush2.bf16.msra.mxu0 0
    %609 = vmatprep.subr.bf16.mxu0 0
    %610 = vmatpush2.bf16.msra.mxu0 0
    %611 = vmatprep.subr.bf16.mxu0 0
    %612 = vmatpush2.bf16.msra.mxu0 0
    %613 = vmatprep.subr.bf16.mxu0 0
    %614 = vmatpush2.bf16.msra.mxu0 0
    %615 = vmatprep.subr.bf16.mxu0 0
    %616 = vmatpush2.bf16.msra.mxu0 0
    %617 = vmatprep.subr.bf16.mxu0 0
    %618 = vmatpush2.bf16.msra.mxu0 0
    %619 = vmatprep.mubr.bf16.mxu0 0
    %620 = vmatmul.mubr.bf16.gmra.mxu0 %v462
    %v621 = vpop.f32.mrf.mxu0
    %v622 = vadd.f32 %v581, %v621
    %v623 = vpop.f32.mrf.mxu0
    %v624 = vpop.f32.mrf.mxu0
    %v625 = vadd.f32 %v584, %v624
    %v626 = vpop.f32.mrf.mxu0
    %627 = vdwg.mxu0
    %v628 = vmax.f32 %v622, 0.0
    %v629 = vmax.f32 %v625, 0.0
    %v630 = vpack.c.bf16 %v629, %v628
    %v631 = vld [vmem:[%s3] sm:$0xf]
    %v632 = vld [vmem:[%s3 + $0x4] sm:$0xf]
    %v633 = vld [vmem:[%s3 + $0x8] sm:$0xf]
    %v634 = vld [vmem:[%s3 + $0xc] sm:$0xf]
    %v635 = vld [vmem:[%s4] sm:$0x1]
    %v637 = vlaneseq
    %v638 = vshrl.u32 %v637, 7
    %v639 = vsub.s32 0, %v638
    %v640 = vrot.slane %v635, %v639
    %v646 = vunpack.c.l.b16 %v631
    %v647 = vunpack.c.l.b16 %v632
    %v648 = vunpack.c.l.b16 %v633
    %v649 = vunpack.c.l.b16 %v634
    %v650 = vpack.c.b16 %v647, %v646
    %v651 = vpack.c.b16 %v649, %v648
    %vm654 = vcmask 261120
    %v656 = vsel %vm654, %v630, 0
    %658 = vmatprep.subr.bf16.mxu0 0
    %659 = vmatpush1.bf16.msra.mxu0 0
    %660 = vmatprep.subr.bf16.mxu0 0
    %661 = vmatpush1.bf16.msra.mxu0 0
    %662 = vmatprep.subr.bf16.mxu0 0
    %663 = vmatpush1.bf16.msra.mxu0 0
    %664 = vmatprep.subr.bf16.mxu0 0
    %665 = vmatpush1.bf16.msra.mxu0 0
    %666 = vmatprep.subr.bf16.mxu0 0
    %667 = vmatpush1.bf16.msra.mxu0 0
    %668 = vmatprep.subr.bf16.mxu0 0
    %669 = vmatpush1.bf16.msra.mxu0 0
    %670 = vmatprep.subr.bf16.mxu0 0
    %671 = vmatpush1.bf16.msra.mxu0 %v651
    %672 = vmatprep.subr.bf16.mxu0 0
    %673 = vmatpush1.bf16.msra.mxu0 %v650
    %674 = vmatprep.subr.bf16.mxu0 0
    %675 = vmatpush2.bf16.msra.mxu0 0
    %676 = vmatprep.subr.bf16.mxu0 0
    %677 = vmatpush2.bf16.msra.mxu0 0
    %678 = vmatprep.subr.bf16.mxu0 0
    %679 = vmatpush2.bf16.msra.mxu0 0
    %680 = vmatprep.subr.bf16.mxu0 0
    %681 = vmatpush2.bf16.msra.mxu0 0
    %682 = vmatprep.subr.bf16.mxu0 0
    %683 = vmatpush2.bf16.msra.mxu0 0
    %684 = vmatprep.subr.bf16.mxu0 0
    %685 = vmatpush2.bf16.msra.mxu0 0
    %686 = vmatprep.subr.bf16.mxu0 0
    %687 = vmatpush2.bf16.msra.mxu0 0
    %688 = vmatprep.subr.bf16.mxu0 0
    %689 = vmatpush2.bf16.msra.mxu0 0
    %690 = vmatprep.mubr.bf16.mxu0 0
    %691 = vmatmul.mubr.bf16.gmra.mxu0 %v656
    %v692 = vpop.f32.mrf.mxu0
    %v693 = vadd.f32 %v640, %v692
    %v694 = vpop.f32.mrf.mxu0
    %v695 = vpop.f32.mrf.mxu0
    %v696 = vadd.f32 %v640, %v695
    %v697 = vpop.f32.mrf.mxu0
    %698 = vdwg.mxu0
    %v699 = vmax.f32 %v693, 0.0
    %v700 = vmax.f32 %v696, 0.0
    %v701 = vpack.c.bf16 %v700, %v699
    %v702 = vld [vmem:[%s5] sm:$0xf]
    %v703 = vld [vmem:[%s5 + $0x4] sm:$0xf]
    %v704 = vld [vmem:[%s5 + $0x8] sm:$0xf]
    %v705 = vld [vmem:[%s5 + $0xc] sm:$0xf]
    %v706 = vld [vmem:[%s6] sm:$0x1]
    %v708 = vlaneseq
    %v709 = vshrl.u32 %v708, 7
    %v710 = vsub.s32 0, %v709
    %v711 = vrot.slane %v706, %v710
    %v717 = vunpack.c.l.b16 %v702
    %v718 = vunpack.c.l.b16 %v703
    %v719 = vunpack.c.l.b16 %v704
    %v720 = vunpack.c.l.b16 %v705
    %v721 = vpack.c.b16 %v718, %v717
    %v722 = vpack.c.b16 %v720, %v719
    %v726 = vsel %vm654, %v701, 0
    %728 = vmatprep.subr.bf16.mxu0 0
    %729 = vmatpush1.bf16.msra.mxu0 0
    %730 = vmatprep.subr.bf16.mxu0 0
    %731 = vmatpush1.bf16.msra.mxu0 0
    %732 = vmatprep.subr.bf16.mxu0 0
    %733 = vmatpush1.bf16.msra.mxu0 0
    %734 = vmatprep.subr.bf16.mxu0 0
    %735 = vmatpush1.bf16.msra.mxu0 0
    %736 = vmatprep.subr.bf16.mxu0 0
    %737 = vmatpush1.bf16.msra.mxu0 0
    %738 = vmatprep.subr.bf16.mxu0 0
    %739 = vmatpush1.bf16.msra.mxu0 0
    %740 = vmatprep.subr.bf16.mxu0 0
    %741 = vmatpush1.bf16.msra.mxu0 %v722
    %742 = vmatprep.subr.bf16.mxu0 0
    %743 = vmatpush1.bf16.msra.mxu0 %v721
    %744 = vmatprep.subr.bf16.mxu0 0
    %745 = vmatpush2.bf16.msra.mxu0 0
    %746 = vmatprep.subr.bf16.mxu0 0
    %747 = vmatpush2.bf16.msra.mxu0 0
    %748 = vmatprep.subr.bf16.mxu0 0
    %749 = vmatpush2.bf16.msra.mxu0 0
    %750 = vmatprep.subr.bf16.mxu0 0
    %751 = vmatpush2.bf16.msra.mxu0 0
    %752 = vmatprep.subr.bf16.mxu0 0
    %753 = vmatpush2.bf16.msra.mxu0 0
    %754 = vmatprep.subr.bf16.mxu0 0
    %755 = vmatpush2.bf16.msra.mxu0 0
    %756 = vmatprep.subr.bf16.mxu0 0
    %757 = vmatpush2.bf16.msra.mxu0 0
    %758 = vmatprep.subr.bf16.mxu0 0
    %759 = vmatpush2.bf16.msra.mxu0 0
    %760 = vmatprep.mubr.bf16.mxu0 0
    %761 = vmatmul.mubr.bf16.gmra.mxu0 %v726
    %v762 = vpop.f32.mrf.mxu0
    %v763 = vadd.f32 %v711, %v762
    %v764 = vpop.f32.mrf.mxu0
    %v765 = vpop.f32.mrf.mxu0
    %v766 = vadd.f32 %v711, %v765
    %v767 = vpop.f32.mrf.mxu0
    %768 = vdwg.mxu0
    %v769 = vmax.f32 %v763, 0.0
    %v770 = vmax.f32 %v766, 0.0
    %v771 = vpack.c.bf16 %v770, %v769
    %v772 = vld [vmem:[%s7] sm:$0xf]
    %v773 = vld [vmem:[%s7 + $0x4] sm:$0xf]
    %v774 = vld [vmem:[%s7 + $0x8] sm:$0xf]
    %v775 = vld [vmem:[%s7 + $0xc] sm:$0xf]
    %v776 = vld [vmem:[%s8] sm:$0x1]
    %v778 = vlaneseq
    %v779 = vshrl.u32 %v778, 7
    %v780 = vsub.s32 0, %v779
    %v781 = vrot.slane %v776, %v780
    %v787 = vunpack.c.l.b16 %v772
    %v788 = vunpack.c.l.b16 %v773
    %v789 = vunpack.c.l.b16 %v774
    %v790 = vunpack.c.l.b16 %v775
    %v791 = vpack.c.b16 %v788, %v787
    %v792 = vpack.c.b16 %v790, %v789
    %v796 = vsel %vm654, %v771, 0
    %798 = vmatprep.subr.bf16.mxu0 0
    %799 = vmatpush1.bf16.msra.mxu0 0
    %800 = vmatprep.subr.bf16.mxu0 0
    %801 = vmatpush1.bf16.msra.mxu0 0
    %802 = vmatprep.subr.bf16.mxu0 0
    %803 = vmatpush1.bf16.msra.mxu0 0
    %804 = vmatprep.subr.bf16.mxu0 0
    %805 = vmatpush1.bf16.msra.mxu0 0
    %806 = vmatprep.subr.bf16.mxu0 0
    %807 = vmatpush1.bf16.msra.mxu0 0
    %808 = vmatprep.subr.bf16.mxu0 0
    %809 = vmatpush1.bf16.msra.mxu0 0
    %810 = vmatprep.subr.bf16.mxu0 0
    %811 = vmatpush1.bf16.msra.mxu0 %v792
    %812 = vmatprep.subr.bf16.mxu0 0
    %813 = vmatpush1.bf16.msra.mxu0 %v791
    %814 = vmatprep.subr.bf16.mxu0 0
    %815 = vmatpush2.bf16.msra.mxu0 0
    %816 = vmatprep.subr.bf16.mxu0 0
    %817 = vmatpush2.bf16.msra.mxu0 0
    %818 = vmatprep.subr.bf16.mxu0 0
    %819 = vmatpush2.bf16.msra.mxu0 0
    %820 = vmatprep.subr.bf16.mxu0 0
    %821 = vmatpush2.bf16.msra.mxu0 0
    %822 = vmatprep.subr.bf16.mxu0 0
    %823 = vmatpush2.bf16.msra.mxu0 0
    %824 = vmatprep.subr.bf16.mxu0 0
    %825 = vmatpush2.bf16.msra.mxu0 0
    %826 = vmatprep.subr.bf16.mxu0 0
    %827 = vmatpush2.bf16.msra.mxu0 0
    %828 = vmatprep.subr.bf16.mxu0 0
    %829 = vmatpush2.bf16.msra.mxu0 0
    %830 = vmatprep.mubr.bf16.mxu0 0
    %831 = vmatmul.mubr.bf16.gmra.mxu0 %v796
    %v832 = vpop.f32.mrf.mxu0
    %v833 = vadd.f32 %v781, %v832
    %v834 = vpop.f32.mrf.mxu0
    %v835 = vpop.f32.mrf.mxu0
    %v836 = vadd.f32 %v781, %v835
    %v837 = vpop.f32.mrf.mxu0
    %838 = vdwg.mxu0
    %v839 = vmax.f32 %v833, 0.0
    %v840 = vmax.f32 %v836, 0.0
    %v841 = vpack.c.bf16 %v840, %v839
    %v842 = vld [vmem:[%s9] sm:$0xff]
    %v843 = vld [vmem:[%s9 + $0x8] sm:$0xff]
    %v844 = vld [vmem:[%s9 + $0x10] sm:$0xff]
    %v845 = vld [vmem:[%s9 + $0x18] sm:$0xf]
    %v846 = vld [vmem:[%s9 + $0x1c] sm:$0xff]
    %v847 = vld [vmem:[%s9 + $0x24] sm:$0xff]
    %v848 = vld [vmem:[%s9 + $0x2c] sm:$0xff]
    %v849 = vld [vmem:[%s9 + $0x34] sm:$0xf]
    %v850 = vld [vmem:[%s9 + $0x38] sm:$0xff]
    %v851 = vld [vmem:[%s9 + $0x40] sm:$0xff]
    %v852 = vld [vmem:[%s9 + $0x48] sm:$0xff]
    %v853 = vld [vmem:[%s9 + $0x50] sm:$0xf]
    %v854 = vld [vmem:[%s9 + $0x54] sm:$0xff]
    %v855 = vld [vmem:[%s9 + $0x5c] sm:$0xff]
    %v856 = vld [vmem:[%s9 + $0x64] sm:$0xff]
    %v857 = vld [vmem:[%s9 + $0x6c] sm:$0xf]
    %v858 = vld [vmem:[%s10] sm:$0x7f]
    %v860 = vlaneseq
    %v861 = vshrl.u32 %v860, 7
    %v862 = vsub.s32 0, %v861
    %v863 = vrot.slane %v858, %v862
    %v864 = vlaneseq
    %v865 = vshrl.u32 %v864, 7
    %v866 = vsub.s32 1, %v865
    %v867 = vrot.slane %v858, %v866
    %v868 = vlaneseq
    %v869 = vshrl.u32 %v868, 7
    %v870 = vsub.s32 2, %v869
    %v871 = vrot.slane %v858, %v870
    %v872 = vlaneseq
    %v873 = vshrl.u32 %v872, 7
    %v874 = vsub.s32 3, %v873
    %v875 = vrot.slane %v858, %v874
    %v876 = vlaneseq
    %v877 = vshrl.u32 %v876, 7
    %v878 = vsub.s32 4, %v877
    %v879 = vrot.slane %v858, %v878
    %v880 = vlaneseq
    %v881 = vshrl.u32 %v880, 7
    %v882 = vsub.s32 5, %v881
    %v883 = vrot.slane %v858, %v882
    %v884 = vlaneseq
    %v885 = vshrl.u32 %v884, 7
    %v886 = vsub.s32 6, %v885
    %v887 = vrot.slane %v858, %v886
    %v911 = vunpack.c.l.b16 %v842
    %v912 = vunpack.c.h.b16 %v842
    %v913 = vunpack.c.l.b16 %v843
    %v914 = vunpack.c.h.b16 %v843
    %v915 = vunpack.c.l.b16 %v844
    %v916 = vunpack.c.h.b16 %v844
    %v917 = vunpack.c.l.b16 %v845
    %v918 = vunpack.c.l.b16 %v846
    %v919 = vunpack.c.h.b16 %v846
    %v920 = vunpack.c.l.b16 %v847
    %v921 = vunpack.c.h.b16 %v847
    %v922 = vunpack.c.l.b16 %v848
    %v923 = vunpack.c.h.b16 %v848
    %v924 = vunpack.c.l.b16 %v849
    %v925 = vunpack.c.l.b16 %v850
    %v926 = vunpack.c.h.b16 %v850
    %v927 = vunpack.c.l.b16 %v851
    %v928 = vunpack.c.h.b16 %v851
    %v929 = vunpack.c.l.b16 %v852
    %v930 = vunpack.c.h.b16 %v852
    %v931 = vunpack.c.l.b16 %v853
    %v932 = vunpack.c.l.b16 %v854
    %v933 = vunpack.c.h.b16 %v854
    %v934 = vunpack.c.l.b16 %v855
    %v935 = vunpack.c.h.b16 %v855
    %v936 = vunpack.c.l.b16 %v856
    %v937 = vunpack.c.h.b16 %v856
    %v938 = vunpack.c.l.b16 %v857
    %v939 = vpack.c.b16 %v918, %v911
    %v940 = vpack.c.b16 %v919, %v912
    %v941 = vpack.c.b16 %v920, %v913
    %v942 = vpack.c.b16 %v921, %v914
    %v943 = vpack.c.b16 %v922, %v915
    %v944 = vpack.c.b16 %v923, %v916
    %v945 = vpack.c.b16 %v924, %v917
    %v946 = vpack.c.b16 %v932, %v925
    %v947 = vpack.c.b16 %v933, %v926
    %v948 = vpack.c.b16 %v934, %v927
    %v949 = vpack.c.b16 %v935, %v928
    %v950 = vpack.c.b16 %v936, %v929
    %v951 = vpack.c.b16 %v937, %v930
    %v952 = vpack.c.b16 %v938, %v931
    %v968 = vsel %vm654, %v841, 0
    %970 = vmatprep.subr.bf16.mxu0 0
    %971 = vmatpush1.bf16.msra.mxu0 0
    %972 = vmatprep.subr.bf16.mxu0 0
    %973 = vmatpush1.bf16.msra.mxu0 0
    %974 = vmatprep.subr.bf16.mxu0 0
    %975 = vmatpush1.bf16.msra.mxu0 0
    %976 = vmatprep.subr.bf16.mxu0 0
    %977 = vmatpush1.bf16.msra.mxu0 0
    %978 = vmatprep.subr.bf16.mxu0 0
    %979 = vmatpush1.bf16.msra.mxu0 0
    %980 = vmatprep.subr.bf16.mxu0 0
    %981 = vmatpush1.bf16.msra.mxu0 0
    %982 = vmatprep.subr.bf16.mxu0 %v947
    %983 = vmatpush1.bf16.msra.mxu0 %v946
    %984 = vmatprep.subr.bf16.mxu0 %v940
    %985 = vmatpush1.bf16.msra.mxu0 %v939
    %986 = vmatprep.subr.bf16.mxu0 0
    %987 = vmatpush2.bf16.msra.mxu0 0
    %988 = vmatprep.subr.bf16.mxu0 0
    %989 = vmatpush2.bf16.msra.mxu0 0
    %990 = vmatprep.subr.bf16.mxu0 0
    %991 = vmatpush2.bf16.msra.mxu0 0
    %992 = vmatprep.subr.bf16.mxu0 0
    %993 = vmatpush2.bf16.msra.mxu0 0
    %994 = vmatprep.subr.bf16.mxu0 0
    %995 = vmatpush2.bf16.msra.mxu0 0
    %996 = vmatprep.subr.bf16.mxu0 0
    %997 = vmatpush2.bf16.msra.mxu0 0
    %998 = vmatprep.subr.bf16.mxu0 0
    %999 = vmatpush2.bf16.msra.mxu0 0
    %1000 = vmatprep.subr.bf16.mxu0 0
    %1001 = vmatpush2.bf16.msra.mxu0 0
    %1002 = vmatprep.mubr.bf16.mxu0 0
    %1003 = vmatmul.mubr.bf16.gmra.mxu0 %v968
    %v1004 = vpop.f32.mrf.mxu0
    %v1005 = vadd.f32 %v863, %v1004
    %v1006 = vpop.f32.mrf.mxu0
    %v1007 = vadd.f32 %v867, %v1006
    %v1008 = vpop.f32.mrf.mxu0
    %v1009 = vadd.f32 %v863, %v1008
    %v1010 = vpop.f32.mrf.mxu0
    %v1011 = vadd.f32 %v867, %v1010
    %1012 = vdwg.mxu0
    %1013 = vmatprep.subr.bf16.mxu0 0
    %1014 = vmatpush1.bf16.msra.mxu0 0
    %1015 = vmatprep.subr.bf16.mxu0 0
    %1016 = vmatpush1.bf16.msra.mxu0 0
    %1017 = vmatprep.subr.bf16.mxu0 0
    %1018 = vmatpush1.bf16.msra.mxu0 0
    %1019 = vmatprep.subr.bf16.mxu0 0
    %1020 = vmatpush1.bf16.msra.mxu0 0
    %1021 = vmatprep.subr.bf16.mxu0 0
    %1022 = vmatpush1.bf16.msra.mxu0 0
    %1023 = vmatprep.subr.bf16.mxu0 0
    %1024 = vmatpush1.bf16.msra.mxu0 0
    %1025 = vmatprep.subr.bf16.mxu0 %v949
    %1026 = vmatpush1.bf16.msra.mxu0 %v948
    %1027 = vmatprep.subr.bf16.mxu0 %v942
    %1028 = vmatpush1.bf16.msra.mxu0 %v941
    %1029 = vmatprep.subr.bf16.mxu0 0
    %1030 = vmatpush2.bf16.msra.mxu0 0
    %1031 = vmatprep.subr.bf16.mxu0 0
    %1032 = vmatpush2.bf16.msra.mxu0 0
    %1033 = vmatprep.subr.bf16.mxu0 0
    %1034 = vmatpush2.bf16.msra.mxu0 0
    %1035 = vmatprep.subr.bf16.mxu0 0
    %1036 = vmatpush2.bf16.msra.mxu0 0
    %1037 = vmatprep.subr.bf16.mxu0 0
    %1038 = vmatpush2.bf16.msra.mxu0 0
    %1039 = vmatprep.subr.bf16.mxu0 0
    %1040 = vmatpush2.bf16.msra.mxu0 0
    %1041 = vmatprep.subr.bf16.mxu0 0
    %1042 = vmatpush2.bf16.msra.mxu0 0
    %1043 = vmatprep.subr.bf16.mxu0 0
    %1044 = vmatpush2.bf16.msra.mxu0 0
    %1045 = vmatprep.mubr.bf16.mxu0 0
    %1046 = vmatmul.mubr.bf16.gmra.mxu0 %v968
    %v1047 = vpop.f32.mrf.mxu0
    %v1048 = vadd.f32 %v871, %v1047
    %v1049 = vpop.f32.mrf.mxu0
    %v1050 = vadd.f32 %v875, %v1049
    %v1051 = vpop.f32.mrf.mxu0
    %v1052 = vadd.f32 %v871, %v1051
    %v1053 = vpop.f32.mrf.mxu0
    %v1054 = vadd.f32 %v875, %v1053
    %1055 = vdwg.mxu0
    %1056 = vmatprep.subr.bf16.mxu0 0
    %1057 = vmatpush1.bf16.msra.mxu0 0
    %1058 = vmatprep.subr.bf16.mxu0 0
    %1059 = vmatpush1.bf16.msra.mxu0 0
    %1060 = vmatprep.subr.bf16.mxu0 0
    %1061 = vmatpush1.bf16.msra.mxu0 0
    %1062 = vmatprep.subr.bf16.mxu0 0
    %1063 = vmatpush1.bf16.msra.mxu0 0
    %1064 = vmatprep.subr.bf16.mxu0 0
    %1065 = vmatpush1.bf16.msra.mxu0 0
    %1066 = vmatprep.subr.bf16.mxu0 0
    %1067 = vmatpush1.bf16.msra.mxu0 0
    %1068 = vmatprep.subr.bf16.mxu0 %v951
    %1069 = vmatpush1.bf16.msra.mxu0 %v950
    %1070 = vmatprep.subr.bf16.mxu0 %v944
    %1071 = vmatpush1.bf16.msra.mxu0 %v943
    %1072 = vmatprep.subr.bf16.mxu0 0
    %1073 = vmatpush2.bf16.msra.mxu0 0
    %1074 = vmatprep.subr.bf16.mxu0 0
    %1075 = vmatpush2.bf16.msra.mxu0 0
    %1076 = vmatprep.subr.bf16.mxu0 0
    %1077 = vmatpush2.bf16.msra.mxu0 0
    %1078 = vmatprep.subr.bf16.mxu0 0
    %1079 = vmatpush2.bf16.msra.mxu0 0
    %1080 = vmatprep.subr.bf16.mxu0 0
    %1081 = vmatpush2.bf16.msra.mxu0 0
    %1082 = vmatprep.subr.bf16.mxu0 0
    %1083 = vmatpush2.bf16.msra.mxu0 0
    %1084 = vmatprep.subr.bf16.mxu0 0
    %1085 = vmatpush2.bf16.msra.mxu0 0
    %1086 = vmatprep.subr.bf16.mxu0 0
    %1087 = vmatpush2.bf16.msra.mxu0 0
    %1088 = vmatprep.mubr.bf16.mxu0 0
    %1089 = vmatmul.mubr.bf16.gmra.mxu0 %v968
    %v1090 = vpop.f32.mrf.mxu0
    %v1091 = vadd.f32 %v879, %v1090
    %v1092 = vpop.f32.mrf.mxu0
    %v1093 = vadd.f32 %v883, %v1092
    %v1094 = vpop.f32.mrf.mxu0
    %v1095 = vadd.f32 %v879, %v1094
    %v1096 = vpop.f32.mrf.mxu0
    %v1097 = vadd.f32 %v883, %v1096
    %1098 = vdwg.mxu0
    %1099 = vmatprep.subr.bf16.mxu0 0
    %1100 = vmatpush1.bf16.msra.mxu0 0
    %1101 = vmatprep.subr.bf16.mxu0 0
    %1102 = vmatpush1.bf16.msra.mxu0 0
    %1103 = vmatprep.subr.bf16.mxu0 0
    %1104 = vmatpush1.bf16.msra.mxu0 0
    %1105 = vmatprep.subr.bf16.mxu0 0
    %1106 = vmatpush1.bf16.msra.mxu0 0
    %1107 = vmatprep.subr.bf16.mxu0 0
    %1108 = vmatpush1.bf16.msra.mxu0 0
    %1109 = vmatprep.subr.bf16.mxu0 0
    %1110 = vmatpush1.bf16.msra.mxu0 0
    %1111 = vmatprep.subr.bf16.mxu0 0
    %1112 = vmatpush1.bf16.msra.mxu0 %v952
    %1113 = vmatprep.subr.bf16.mxu0 0
    %1114 = vmatpush1.bf16.msra.mxu0 %v945
    %1115 = vmatprep.subr.bf16.mxu0 0
    %1116 = vmatpush2.bf16.msra.mxu0 0
    %1117 = vmatprep.subr.bf16.mxu0 0
    %1118 = vmatpush2.bf16.msra.mxu0 0
    %1119 = vmatprep.subr.bf16.mxu0 0
    %1120 = vmatpush2.bf16.msra.mxu0 0
    %1121 = vmatprep.subr.bf16.mxu0 0
    %1122 = vmatpush2.bf16.msra.mxu0 0
    %1123 = vmatprep.subr.bf16.mxu0 0
    %1124 = vmatpush2.bf16.msra.mxu0 0
    %1125 = vmatprep.subr.bf16.mxu0 0
    %1126 = vmatpush2.bf16.msra.mxu0 0
    %1127 = vmatprep.subr.bf16.mxu0 0
    %1128 = vmatpush2.bf16.msra.mxu0 0
    %1129 = vmatprep.subr.bf16.mxu0 0
    %1130 = vmatpush2.bf16.msra.mxu0 0
    %1131 = vmatprep.mubr.bf16.mxu0 0
    %1132 = vmatmul.mubr.bf16.gmra.mxu0 %v968
    %v1133 = vpop.f32.mrf.mxu0
    %v1134 = vadd.f32 %v887, %v1133
    %v1135 = vpop.f32.mrf.mxu0
    %v1136 = vpop.f32.mrf.mxu0
    %v1137 = vadd.f32 %v887, %v1136
    %v1138 = vpop.f32.mrf.mxu0
    %1139 = vdwg.mxu0
    %v1140 = vand.u32 2147483647, %v1005
    %v1141 = vand.u32 2147483647, %v1007
    %v1142 = vand.u32 2147483647, %v1048
    %v1143 = vand.u32 2147483647, %v1050
    %v1144 = vand.u32 2147483647, %v1091
    %v1145 = vand.u32 2147483647, %v1093
    %v1146 = vand.u32 2147483647, %v1134
    %v1147 = vand.u32 2147483647, %v1009
    %v1148 = vand.u32 2147483647, %v1011
    %v1149 = vand.u32 2147483647, %v1052
    %v1150 = vand.u32 2147483647, %v1054
    %v1151 = vand.u32 2147483647, %v1095
    %v1152 = vand.u32 2147483647, %v1097
    %v1153 = vand.u32 2147483647, %v1137
    %v1154 = vsub.f32 0.0, %v1140
    %v1155 = vsub.f32 0.0, %v1141
    %v1156 = vsub.f32 0.0, %v1142
    %v1157 = vsub.f32 0.0, %v1143
    %v1158 = vsub.f32 0.0, %v1144
    %v1159 = vsub.f32 0.0, %v1145
    %v1160 = vsub.f32 0.0, %v1146
    %v1161 = vsub.f32 0.0, %v1147
    %v1162 = vsub.f32 0.0, %v1148
    %v1163 = vsub.f32 0.0, %v1149
    %v1164 = vsub.f32 0.0, %v1150
    %v1165 = vsub.f32 0.0, %v1151
    %v1166 = vsub.f32 0.0, %v1152
    %v1167 = vsub.f32 0.0, %v1153
    %v1168 = vmul.f32 %v1154, 1.442695
    %v1169 = vpow.pop %v1168
    %v1170 = vmul.f32 %v1155, 1.442695
    %v1171 = vpow.pop %v1170
    %v1172 = vmul.f32 %v1156, 1.442695
    %v1173 = vpow.pop %v1172
    %v1174 = vmul.f32 %v1157, 1.442695
    %v1175 = vpow.pop %v1174
    %v1176 = vmul.f32 %v1158, 1.442695
    %v1177 = vpow.pop %v1176
    %v1178 = vmul.f32 %v1159, 1.442695
    %v1179 = vpow.pop %v1178
    %v1180 = vmul.f32 %v1160, 1.442695
    %v1181 = vpow.pop %v1180
    %v1182 = vmul.f32 %v1161, 1.442695
    %v1183 = vpow.pop %v1182
    %v1184 = vmul.f32 %v1162, 1.442695
    %v1185 = vpow.pop %v1184
    %v1186 = vmul.f32 %v1163, 1.442695
    %v1187 = vpow.pop %v1186
    %v1188 = vmul.f32 %v1164, 1.442695
    %v1189 = vpow.pop %v1188
    %v1190 = vmul.f32 %v1165, 1.442695
    %v1191 = vpow.pop %v1190
    %v1192 = vmul.f32 %v1166, 1.442695
    %v1193 = vpow.pop %v1192
    %v1194 = vmul.f32 %v1167, 1.442695
    %v1195 = vpow.pop %v1194
    %vm1196 = vcmp.ge.f32.partialorder %v1005, 0.0
    %vm1197 = vcmp.ge.f32.partialorder %v1007, 0.0
    %vm1198 = vcmp.ge.f32.partialorder %v1048, 0.0
    %vm1199 = vcmp.ge.f32.partialorder %v1050, 0.0
    %vm1200 = vcmp.ge.f32.partialorder %v1091, 0.0
    %vm1201 = vcmp.ge.f32.partialorder %v1093, 0.0
    %vm1202 = vcmp.ge.f32.partialorder %v1134, 0.0
    %vm1203 = vcmp.ge.f32.partialorder %v1009, 0.0
    %vm1204 = vcmp.ge.f32.partialorder %v1011, 0.0
    %vm1205 = vcmp.ge.f32.partialorder %v1052, 0.0
    %vm1206 = vcmp.ge.f32.partialorder %v1054, 0.0
    %vm1207 = vcmp.ge.f32.partialorder %v1095, 0.0
    %vm1208 = vcmp.ge.f32.partialorder %v1097, 0.0
    %vm1209 = vcmp.ge.f32.partialorder %v1137, 0.0
    %v1210 = vadd.f32 %v1169, 1.0
    %v1211 = vadd.f32 %v1171, 1.0
    %v1212 = vadd.f32 %v1173, 1.0
    %v1213 = vadd.f32 %v1175, 1.0
    %v1214 = vadd.f32 %v1177, 1.0
    %v1215 = vadd.f32 %v1179, 1.0
    %v1216 = vadd.f32 %v1181, 1.0
    %v1217 = vadd.f32 %v1183, 1.0
    %v1218 = vadd.f32 %v1185, 1.0
    %v1219 = vadd.f32 %v1187, 1.0
    %v1220 = vadd.f32 %v1189, 1.0
    %v1221 = vadd.f32 %v1191, 1.0
    %v1222 = vadd.f32 %v1193, 1.0
    %v1223 = vadd.f32 %v1195, 1.0
    %v1224 = vrcp.pop %v1210
    %v1225 = vmul.f32 1.0, %v1224
    %v1226 = vrcp.pop %v1211
    %v1227 = vmul.f32 1.0, %v1226
    %v1228 = vrcp.pop %v1212
    %v1229 = vmul.f32 1.0, %v1228
    %v1230 = vrcp.pop %v1213
    %v1231 = vmul.f32 1.0, %v1230
    %v1232 = vrcp.pop %v1214
    %v1233 = vmul.f32 1.0, %v1232
    %v1234 = vrcp.pop %v1215
    %v1235 = vmul.f32 1.0, %v1234
    %v1236 = vrcp.pop %v1216
    %v1237 = vmul.f32 1.0, %v1236
    %v1238 = vrcp.pop %v1217
    %v1239 = vmul.f32 1.0, %v1238
    %v1240 = vrcp.pop %v1218
    %v1241 = vmul.f32 1.0, %v1240
    %v1242 = vrcp.pop %v1219
    %v1243 = vmul.f32 1.0, %v1242
    %v1244 = vrcp.pop %v1220
    %v1245 = vmul.f32 1.0, %v1244
    %v1246 = vrcp.pop %v1221
    %v1247 = vmul.f32 1.0, %v1246
    %v1248 = vrcp.pop %v1222
    %v1249 = vmul.f32 1.0, %v1248
    %v1250 = vrcp.pop %v1223
    %v1251 = vmul.f32 1.0, %v1250
    %v1252 = vmul.f32 %v1169, %v1224
    %v1253 = vmul.f32 %v1171, %v1226
    %v1254 = vmul.f32 %v1173, %v1228
    %v1255 = vmul.f32 %v1175, %v1230
    %v1256 = vmul.f32 %v1177, %v1232
    %v1257 = vmul.f32 %v1179, %v1234
    %v1258 = vmul.f32 %v1181, %v1236
    %v1259 = vmul.f32 %v1183, %v1238
    %v1260 = vmul.f32 %v1185, %v1240
    %v1261 = vmul.f32 %v1187, %v1242
    %v1262 = vmul.f32 %v1189, %v1244
    %v1263 = vmul.f32 %v1191, %v1246
    %v1264 = vmul.f32 %v1193, %v1248
    %v1265 = vmul.f32 %v1195, %v1250
    %v1266 = vsel %vm1196, %v1225, %v1252
    %v1267 = vsel %vm1197, %v1227, %v1253
    %v1268 = vsel %vm1198, %v1229, %v1254
    %v1269 = vsel %vm1199, %v1231, %v1255
    %v1270 = vsel %vm1200, %v1233, %v1256
    %v1271 = vsel %vm1201, %v1235, %v1257
    %v1272 = vsel %vm1202, %v1237, %v1258
    %v1273 = vsel %vm1203, %v1239, %v1259
    %v1274 = vsel %vm1204, %v1241, %v1260
    %v1275 = vsel %vm1205, %v1243, %v1261
    %v1276 = vsel %vm1206, %v1245, %v1262
    %v1277 = vsel %vm1207, %v1247, %v1263
    %v1278 = vsel %vm1208, %v1249, %v1264
    %v1279 = vsel %vm1209, %v1251, %v1265
    %1280 = vst [vmem:[#allocation2] sm:$0xff] %v1266
    %1281 = vst [vmem:[#allocation2 + $0x8] sm:$0xff] %v1267
    %1282 = vst [vmem:[#allocation2 + $0x10] sm:$0xff] %v1268
    %1283 = vst [vmem:[#allocation2 + $0x18] sm:$0xff] %v1269
    %1284 = vst [vmem:[#allocation2 + $0x20] sm:$0xff] %v1270
    %1285 = vst [vmem:[#allocation2 + $0x28] sm:$0xff] %v1271
    %1286 = vst.msk [vmem:[#allocation2 + $0x30] sm:$0xff] %vm460, %v1272
    %1287 = vst [vmem:[#allocation2 + $0x38] sm:$0xff] %v1273
    %1288 = vst [vmem:[#allocation2 + $0x40] sm:$0xff] %v1274
    %1289 = vst [vmem:[#allocation2 + $0x48] sm:$0xff] %v1275
    %1290 = vst [vmem:[#allocation2 + $0x50] sm:$0xff] %v1276
    %1291 = vst [vmem:[#allocation2 + $0x58] sm:$0xff] %v1277
    %1292 = vst [vmem:[#allocation2 + $0x60] sm:$0xff] %v1278
    %1293 = vst.msk [vmem:[#allocation2 + $0x68] sm:$0xff] %vm460, %v1279
    // Predicated region
    $region46: #{tpu_custom_call.1} parent=1 // pred_check
      _
    $region47: #{tpu_custom_call.1} parent=1 // pred_check_branch
      %1295 = sbr.rel (0) target = $region49
    $region48: #{tpu_custom_call.1} parent=1 // pred_region
      %s1297 = ssub.s32 1792, 1792
      %1298 = vsyncadd [#allocation3], %s1297
      %s1299 = sshll.u32 [#allocation2], 4
      %s1300 = int_to_ptr.vmem [resolvable:$true] %s1299
      %1305 = dma.vmem_to_hbm [thread:$0]  %s1300, 1792, %s11, [#allocation3], 896, 896, 56
    $region49: #{tpu_custom_call.1} parent=1 // pred_fallthru
      _
    // Predicated region
    $region50: #{tpu_custom_call.1} parent=1 // pred_check
      _
    $region51: #{tpu_custom_call.1} parent=1 // pred_check_branch
      %1307 = sbr.rel (0) target = $region53
    $region52: #{tpu_custom_call.1} parent=1 // pred_region
      %1308 = dma.done [#allocation3], 1792
    $region53: #{tpu_custom_call.1} parent=1 // pred_fallthru
      _
    %1309 = vsyncpa [#allocation3], 1

</llo_original>
